<compile_context>
chip_gen: v6e
topology: v6e:2x2x1
jax: 0.10.0
libtpu: 0.0.40
codegen_flags: <defaults>
</compile_context>

<pallas_src>
import math

import jax
import jax.numpy as jnp
from jax.experimental import pallas as pl
from jax.experimental.pallas import tpu as pltpu


_MIB = 1024 * 1024
# Below this total size a single grid step is best (the ~0.35 us/step launch
# overhead dominates); above it we keep >= 2 parallel blocks for v7x megacore.
_SMALL_PROBLEM_BYTES = 2 * _MIB


def make_pe_table(max_len: int, d_model: int, dtype=jnp.float32) -> jnp.ndarray:
    """Deterministic sin/cos positional-encoding table, shape (max_len, d_model).

    Build it directly in the activation dtype so the forward pass never pays a
    per-call cast of the (potentially max_len=5000-row) table.
    """
    position = jnp.arange(max_len, dtype=jnp.float32)[:, None]            # (max_len, 1)
    div_term = jnp.exp(
        jnp.arange(0, d_model, 2, dtype=jnp.float32) * (-math.log(10000.0) / d_model)
    )                                                                      # (ceil(d/2),)
    angles = position * div_term                                           # (max_len, ceil(d/2))
    pe = jnp.zeros((max_len, d_model), dtype=jnp.float32)
    pe = pe.at[:, 0::2].set(jnp.sin(angles))
    # Handles odd d_model too (the classic PyTorch snippet shape-mismatches there).
    pe = pe.at[:, 1::2].set(jnp.cos(angles[:, : d_model // 2]))
    return pe.astype(dtype)


# ----------------------------------------------------------------------------
# Small helpers
# ----------------------------------------------------------------------------
def _cdiv(a: int, b: int) -> int:
    return -(-a // b)


def _round_down(v: int, m: int) -> int:
    return (v // m) * m


def _round_up(v: int, m: int) -> int:
    return _cdiv(v, m) * m


def _sublane_multiple(itemsize: int) -> int:
    # Sub-32-bit dtypes pack along sublanes: f32 -> 8, bf16 -> 16, int8/fp8 -> 32.
    return max(8, 32 // max(1, itemsize))


def _vmem_budget_and_limit():
    """Generation-aware VMEM budget for block sizing + vmem_limit_bytes to request."""
    cap = 64 * _MIB                           # conservative fallback (v7x-sized)
    try:
        info = pltpu.get_tpu_info()
        cap = int(getattr(info, "vmem_capacity_bytes", cap))
    except Exception:
        pass
    limit = min(cap // 2, 64 * _MIB)          # 64 MiB on v5e/v6e (128 MiB), 32 MiB on v7x (64 MiB)
    budget = limit - limit // 4               # headroom for compiler scratch / misc
    return budget, limit


# ----------------------------------------------------------------------------
# Tile selection
# ----------------------------------------------------------------------------
def _tiles_3d(B: int, S: int, D: int, itemsize: int, budget: int):
    """(tb, ts) batch/sequence block sizes for the lane-dense (D % 128 == 0) path."""
    sub = _sublane_multiple(itemsize)
    row_bytes = D * itemsize

    def step_bytes(tb, ts):
        # 2x double-buffered x and out blocks + 2x pe block + one block of slack
        # for the leading-dim broadcast temp inside the body.
        return (5 * tb + 2) * ts * row_bytes

    if step_bytes(1, S) <= budget:
        # Full-S sequence blocks: the pe block index never changes across the inner
        # batch loop, so its DMA is issued exactly once.  Grow TB to cut grid steps.
        ts = S
        tb = min(B, max(1, (budget // (S * row_bytes) - 2) // 5))
    else:
        # Rows too large for full-S blocks: tile the sequence axis, one batch per block.
        tb = 1
        max_ts = max(8, (budget // row_bytes - 2) // 7)
        ts = _round_down(max_ts, sub) or _round_down(max_ts, 8) or 8
        ts = min(ts, S)

    # v7x megacore: keep >= 2 parallel grid blocks once the problem is big enough
    # that per-step launch overhead no longer dominates.
    total_bytes = B * S * row_bytes
    if total_bytes > _SMALL_PROBLEM_BYTES and _cdiv(S, ts) * _cdiv(B, tb) < 2:
        if B >= 2:
            tb = _cdiv(B, 2)                 # leading block dim: no alignment rule
        elif S >= 2 * sub:
            ts = min(S, _round_up(_cdiv(S, 2), sub))
    return tb, ts


def _tiles_flat(B: int, L: int, itemsize: int, budget: int):
    """(tb, tl) row/lane block sizes for the flattened (B, S*D) path."""

    def step_bytes(tb, tl):
        # 2x double-buffered x and out blocks + 2x pe row block.
        return (4 * tb + 2) * tl * itemsize

    tb_min = B if B < 8 else 8               # sublane block dim: multiple of 8 or == B
    if step_bytes(tb_min, L) <= budget:
        tl = L
        max_tb = (budget // (L * itemsize) - 2) // 4
        tb = B if max_tb >= B else max(tb_min, _round_down(max_tb, 8))
    else:
        # Long flattened rows: tile the lane axis in 128-lane multiples instead of
        # forcing full-L rows (keeps every generation inside its VMEM budget).
        tb = tb_min
        max_tl = budget // ((4 * tb + 2) * itemsize)
        tl = max(128, _round_down(max_tl, 128))

    total_bytes = B * L * itemsize
    if total_bytes > _SMALL_PROBLEM_BYTES and _cdiv(B, tb) * _cdiv(L, tl) < 2:
        if B > 8:
            tb = max(8, _round_down(_cdiv(B, 2), 8))
        elif L >= 256 and tl == L:
            half = _round_up(_cdiv(L, 2), 128)
            if half < L:
                tl = half
    return tb, tl


# ----------------------------------------------------------------------------
# Kernel + wrapper
# ----------------------------------------------------------------------------
def _pe_add_kernel(x_ref, pe_ref, o_ref):
    # Lane-dense path:  x/o blocks are (TB, TS, D), pe block is (TS, D)
    #                   -> broadcast over the leading (major-most) batch dim.
    # Flattened path:   x/o blocks are (TB, TL),    pe block is (1, TL)
    #                   -> cheap sublane broadcast.
    o_ref[...] = x_ref[...] + pe_ref[...]


def positional_encoding_forward(
    x: jnp.ndarray, pe_table: jnp.ndarray, *, vmem_budget_bytes: int | None = None
) -> jnp.ndarray:
    """x: (B, S, D); pe_table: (max_len, D).  Returns x + pe[:S] (eval-mode dropout)."""
    B, S, D = x.shape
    max_len, d_model = pe_table.shape
    if S > max_len:
        raise ValueError(f"sequence length {S} exceeds positional-encoding max_len {max_len}")
    if d_model != D:
        raise ValueError(f"d_model mismatch: x has {D}, pe_table has {d_model}")

    budget, vmem_limit = _vmem_budget_and_limit()
    if vmem_budget_bytes is not None:
        budget = int(vmem_budget_bytes)

    # Prefer building the table in the activation dtype (make_pe_table(dtype=...));
    # this cast is only a fallback and costs one extra pass over the table per call.
    pe = pe_table if pe_table.dtype == x.dtype else pe_table.astype(x.dtype)
    itemsize = jnp.dtype(x.dtype).itemsize

    params = pltpu.CompilerParams(
        dimension_semantics=("parallel", "parallel"),
        vmem_limit_bytes=int(vmem_limit),
    )

    if D % 128 == 0:
        # Lane-dense d_model: keep (B, S, D); blocks cover TB batches x TS positions.
        tb, ts = _tiles_3d(B, S, D, itemsize, budget)

        # pe BlockSpec legality: the sequence block dim must be a multiple of 8 or
        # equal the *table's* own leading dim.  Only when we picked ts == S with S
        # not 8-aligned (and S != max_len) do we window the table to S rows.
        pe_in = pe
        if ts == S and (S % 8 != 0) and (S != max_len):
            pe_in = pe[:S]

        # Grid ordered (S_tiles, B_tiles): the pe block index is constant across the
        # inner batch loop, so Pallas skips its DMA between consecutive steps.
        grid = (_cdiv(S, ts), _cdiv(B, tb))
        return pl.pallas_call(
            _pe_add_kernel,
            out_shape=jax.ShapeDtypeStruct((B, S, D), x.dtype),
            grid=grid,
            in_specs=[
                pl.BlockSpec((tb, ts, D), lambda s, b: (b, s, 0)),
                pl.BlockSpec((ts, D), lambda s, b: (s, 0)),
            ],
            out_specs=pl.BlockSpec((tb, ts, D), lambda s, b: (b, s, 0)),
            compiler_params=params,
        )(x, pe_in)

    # Small / non-lane-dense d_model: flatten (S, D) into one last axis so stores
    # are lane-dense (full-width vst once L >= 128), tiling both rows and lanes.
    L = S * D
    x2 = x.reshape(B, L)
    pe2 = pe[:S].reshape(1, L)   # S*D is small on this path; the slice/reshape is cheap
    tb, tl = _tiles_flat(B, L, itemsize, budget)
    # Grid ordered (L_tiles, B_tiles): pe is re-fetched only when the L-tile changes.
    grid = (_cdiv(L, tl), _cdiv(B, tb))
    out2 = pl.pallas_call(
        _pe_add_kernel,
        out_shape=jax.ShapeDtypeStruct((B, L), x.dtype),
        grid=grid,
        in_specs=[
            pl.BlockSpec((tb, tl), lambda l, b: (b, l)),
            pl.BlockSpec((1, tl), lambda l, b: (0, l)),
        ],
        out_specs=pl.BlockSpec((tb, tl), lambda l, b: (b, l)),
        compiler_params=params,
    )(x2, pe2)
    return out2.reshape(B, S, D)


if __name__ == "__main__":
    # 1) Flattened path (d_model not lane-dense): batch=2, seq=8, d_model=32.
    B, S, D, MAX_LEN = 2, 8, 32, 64
    x = jax.random.normal(jax.random.PRNGKey(0), (B, S, D), dtype=jnp.float32)
    pe_table = make_pe_table(MAX_LEN, D, dtype=x.dtype)
    out = jax.block_until_ready(positional_encoding_forward(x, pe_table))
    ref = x + pe_table[:S][None]
    assert out.shape == (B, S, D) and out.dtype == x.dtype
    assert jnp.allclose(out, ref, atol=1e-6), "mismatch (flattened path)"

    # 2) Lane-dense 3-D path, whole problem in one block.
    B2, S2, D2 = 2, 16, 128
    x2 = jax.random.normal(jax.random.PRNGKey(1), (B2, S2, D2), dtype=jnp.float32)
    pe2 = make_pe_table(32, D2, dtype=x2.dtype)
    out2 = jax.block_until_ready(positional_encoding_forward(x2, pe2))
    assert jnp.allclose(out2, x2 + pe2[:S2][None], atol=1e-6), "mismatch (3-D path)"

    # 3) Lane-dense path with S not 8-aligned (exercises the pe window fallback).
    B3, S3, D3 = 3, 12, 128
    x3 = jax.random.normal(jax.random.PRNGKey(2), (B3, S3, D3), dtype=jnp.float32)
    pe3 = make_pe_table(32, D3, dtype=x3.dtype)
    out3 = jax.block_until_ready(positional_encoding_forward(x3, pe3))
    assert jnp.allclose(out3, x3 + pe3[:S3][None], atol=1e-6), "mismatch (3-D, odd S)"

    # 4) Lane-dense path forced to tile the sequence axis (tiny budget override).
    B4, S4, D4 = 2, 32, 128
    x4 = jax.random.normal(jax.random.PRNGKey(3), (B4, S4, D4), dtype=jnp.float32)
    pe4 = make_pe_table(64, D4, dtype=x4.dtype)
    out4 = jax.block_until_ready(
        positional_encoding_forward(x4, pe4, vmem_budget_bytes=64 * 1024))
    assert jnp.allclose(out4, x4 + pe4[:S4][None], atol=1e-6), "mismatch (3-D, S-tiled)"

    # 5) Flattened path forced to tile the lane axis (tiny budget override).
    B5, S5, D5 = 2, 64, 32
    x5 = jax.random.normal(jax.random.PRNGKey(4), (B5, S5, D5), dtype=jnp.float32)
    pe5 = make_pe_table(128, D5, dtype=x5.dtype)
    out5 = jax.block_until_ready(
        positional_encoding_forward(x5, pe5, vmem_budget_bytes=16 * 1024))
    assert jnp.allclose(out5, x5 + pe5[:S5][None], atol=1e-6), "mismatch (flat, L-tiled)"

    print("KERNEL_OK")
</pallas_src>

<mosaic_0001>
module attributes {stable_mosaic.version = 11 : i64} {
  func.func @_pe_add_kernel(%arg0: i32, %arg1: i32, %arg2: memref<2x256xf32, #tpu.memory_space<vmem>>, %arg3: memref<1x256xf32, #tpu.memory_space<vmem>>, %arg4: memref<2x256xf32, #tpu.memory_space<vmem>>) attributes {dimension_semantics = [#tpu.dimension_semantics<parallel>, #tpu.dimension_semantics<parallel>], iteration_bounds = array<i64: 1, 1>, scalar_prefetch = 0 : i64, scratch_operands = 0 : i64, tpu.core_type = #tpu.core_type<tc>, window_params = [{transform_indices = @transform_0, window_bounds = array<i64: 2, 256>}, {transform_indices = @transform_1, window_bounds = array<i64: 1, 256>}, {transform_indices = @transform_2, window_bounds = array<i64: 2, 256>}]} {
    %c0 = arith.constant 0 : index
    %c0_0 = arith.constant 0 : index
    %0 = vector.load %arg2[%c0, %c0_0] : memref<2x256xf32, #tpu.memory_space<vmem>>, vector<2x256xf32>
    %c0_1 = arith.constant 0 : index
    %c0_2 = arith.constant 0 : index
    %1 = vector.load %arg3[%c0_1, %c0_2] : memref<1x256xf32, #tpu.memory_space<vmem>>, vector<1x256xf32>
    %2 = vector.broadcast %1 : vector<1x256xf32> to vector<2x256xf32>
    %3 = arith.addf %0, %2 : vector<2x256xf32>
    %c0_3 = arith.constant 0 : index
    %c0_4 = arith.constant 0 : index
    %4 = vector.load %arg4[%c0_3, %c0_4] : memref<2x256xf32, #tpu.memory_space<vmem>>, vector<2x256xf32>
    tpu.vector_store %arg4[%c0_3, %c0_4], %3 {strides = array<i32>} : memref<2x256xf32, #tpu.memory_space<vmem>>, vector<2x256xf32>,
    return
  }
  func.func @transform_0(%arg0: i32, %arg1: i32) -> (i32, i32) {
    %c0_i32 = arith.constant 0 : i32
    return %arg1, %arg0 : i32, i32
  }
  func.func @transform_1(%arg0: i32, %arg1: i32) -> (i32, i32) {
    %c0_i32 = arith.constant 0 : i32
    %c0_i32_0 = arith.constant 0 : i32
    return %c0_i32, %arg0 : i32, i32
  }
  func.func @transform_2(%arg0: i32, %arg1: i32) -> (i32, i32) {
    %c0_i32 = arith.constant 0 : i32
    return %arg1, %arg0 : i32, i32
  }
}

</mosaic_0001>

<llo_original>
// kernel: tpu_custom_call.1
$region0: #{tpu_custom_call.1}
  #allocation0 [shape = 'u32[]', space=smem, size = 0x4, offset = 0x4, fixed_abs, tag = 'smem constant byte address 0x4 - core index']
  #allocation1 [shape = 'u32[144,128]{1,0:T(1,128)}', space=vmem, size = 0x12000, scoped, tag = 'internal scratch']
  %s0 = inlined_call_operand.hbm [shape: f32[2,256], index: 0, kind: input, shape index: {}]
  %s1 = inlined_call_operand.hbm [shape: f32[1,256], index: 1, kind: input, shape index: {}]
  %s2 = inlined_call_operand.hbm [shape: f32[2,256], index: 2, kind: output, shape index: {}]
  %s3 = sld [smem:[#allocation0]]
  $region26: #{tpu_custom_call.1} parent=0
    _
  %s5 = ssub.s32 1, %s3
  %s6 = scalar_select 0, %s5, %s3
  $region1: #{tpu_custom_call.1} parent=0
    #allocation2 [shape = 'u8[2048]{0}', space=vmem, size = 0x800, scoped, tag = 'input window, operand 0, single buffered']
    #allocation3 [shape = 's32[1]{0}', space=sflag, size = 0x4, scoped, tag = 'scoped memory for tpu_custom_call.1']
    #allocation4 [shape = 's32[1]{0}', space=sflag, size = 0x4, scoped, tag = 'scoped memory for tpu_custom_call.1']
    #allocation5 [shape = 'u8[1024]{0}', space=vmem, size = 0x400, scoped, tag = 'input window, operand 1, single buffered']
    #allocation6 [shape = 's32[1]{0}', space=sflag, size = 0x4, scoped, tag = 'scoped memory for tpu_custom_call.1']
    #allocation7 [shape = 'u8[2048]{0}', space=vmem, size = 0x800, scoped, tag = 'output window, operand 0, single buffered']
    %7 = vsyncpa [#allocation3], 0
    %8 = vsyncpa [#allocation6], 0
    %9 = vsyncpa [#allocation4], 0
    // Predicated region
    $region2: #{tpu_custom_call.1} parent=1 // pred_check
      _
    $region3: #{tpu_custom_call.1} parent=1 // pred_check_branch
      %11 = sbr.rel (0) target = $region5
    $region4: #{tpu_custom_call.1} parent=1 // pred_region
      %s13 = ssub.s32 64, 64
      %14 = vsyncadd [#allocation3], %s13
      %s16 = sshll.u32 [#allocation2], 4
      %s17 = int_to_ptr.vmem [resolvable:$true] %s16
      %19 = dma.hbm_to_vmem [thread:$0]  %s0, 64, %s17, [#allocation3]
    $region5: #{tpu_custom_call.1} parent=1 // pred_fallthru
      _
    // Predicated region
    $region6: #{tpu_custom_call.1} parent=1 // pred_check
      _
    $region7: #{tpu_custom_call.1} parent=1 // pred_check_branch
      %21 = sbr.rel (0) target = $region9
    $region8: #{tpu_custom_call.1} parent=1 // pred_region
      %s23 = ssub.s32 32, 32
      %24 = vsyncadd [#allocation6], %s23
      %s26 = sshll.u32 [#allocation5], 4
      %s27 = int_to_ptr.vmem [resolvable:$true] %s26
      %29 = dma.hbm_to_vmem [thread:$0]  %s1, 32, %s27, [#allocation6]
    $region9: #{tpu_custom_call.1} parent=1 // pred_fallthru
      _
    // Predicated region
    $region10: #{tpu_custom_call.1} parent=1 // pred_check
      _
    $region11: #{tpu_custom_call.1} parent=1 // pred_check_branch
      %31 = sbr.rel (0) target = $region13
    $region12: #{tpu_custom_call.1} parent=1 // pred_region
      %32 = dma.done [#allocation3], 64
    $region13: #{tpu_custom_call.1} parent=1 // pred_fallthru
      _
    // Predicated region
    $region14: #{tpu_custom_call.1} parent=1 // pred_check
      _
    $region15: #{tpu_custom_call.1} parent=1 // pred_check_branch
      %34 = sbr.rel (0) target = $region17
    $region16: #{tpu_custom_call.1} parent=1 // pred_region
      %35 = dma.done [#allocation6], 32
    $region17: #{tpu_custom_call.1} parent=1 // pred_fallthru
      _
    %v36 = vld [vmem:[#allocation2] sm:$0xf]
    %v37 = vld [vmem:[#allocation5] sm:$0x3]
    %v39 = vlaneseq
    %v40 = vshrl.u32 %v39, 7
    %v41 = vsub.s32 0, %v40
    %v42 = vrot.slane %v37, %v41
    %v43 = vlaneseq
    %v44 = vshrl.u32 %v43, 7
    %v45 = vsub.s32 1, %v44
    %v46 = vrot.slane %v37, %v45
    %v47 = vcombine.low %v42, %v46
    %v49 = vunpack.c.l.s4 1983009808
    %v50 = vunpack.c.0.s8 %v49
    %v51 = vlaneseq
    %v52 = vshrl.u32 %v51, 7
    %v53 = vsub.s32 %v50, %v52
    %v54 = vrot.slane %v47, %v53
    %v56 = vadd.f32 %v36, %v54
    %57 = vst [vmem:[#allocation7] sm:$0xf] %v56
    // Predicated region
    $region18: #{tpu_custom_call.1} parent=1 // pred_check
      _
    $region19: #{tpu_custom_call.1} parent=1 // pred_check_branch
      %59 = sbr.rel (0) target = $region21
    $region20: #{tpu_custom_call.1} parent=1 // pred_region
      %s61 = ssub.s32 64, 64
      %62 = vsyncadd [#allocation4], %s61
      %s64 = sshll.u32 [#allocation7], 4
      %s65 = int_to_ptr.vmem [resolvable:$true] %s64
      %67 = dma.vmem_to_hbm [thread:$0]  %s65, 64, %s2, [#allocation4]
    $region21: #{tpu_custom_call.1} parent=1 // pred_fallthru
      _
    // Predicated region
    $region22: #{tpu_custom_call.1} parent=1 // pred_check
      _
    $region23: #{tpu_custom_call.1} parent=1 // pred_check_branch
      %69 = sbr.rel (0) target = $region25
    $region24: #{tpu_custom_call.1} parent=1 // pred_region
      %70 = dma.done [#allocation4], 64
    $region25: #{tpu_custom_call.1} parent=1 // pred_fallthru
      _
    %71 = vsyncpa [#allocation3], 1
    %72 = vsyncpa [#allocation6], 1
    %73 = vsyncpa [#allocation4], 1

</llo_original>
